<compile_context>
chip_gen: v7x
topology: tpu7x:2x2x1
jax: 0.10.0
libtpu: 0.0.40
codegen_flags: <defaults>
</compile_context>

<pallas_src>
import functools

import jax
import jax.numpy as jnp
from jax.experimental import pallas as pl
from jax.experimental.pallas import tpu as pltpu


_TB_MAX = 32768   # max lanes (batch elements) per grid block
_TC_INNER = 2048  # lanes per in-kernel compute chunk


def _round_up(n, m):
    return ((n + m - 1) // m) * m


def _pick_tiles(B):
    """Return (batch_block, inner_chunk) lane sizes. inner_chunk divides batch_block."""
    if B <= _TC_INNER:
        # Single block covering the exact array: block dims == full array dims,
        # so no (8,128) divisibility requirement applies. One compute chunk.
        return B, B
    # Large batch: lane-dense blocks that are multiples of the inner chunk.
    # Aim for >= 2 grid steps so v7x's two TensorCores both get work.
    tb = min(_TB_MAX, _round_up(-(-B // 2), _TC_INNER))
    return tb, _TC_INNER


def _lin_kernel(xt_ref, w1_ref, b1_ref, w2_ref, b2_ref, o_ref, *, tc):
    # xt_ref : (D_in, TB)    -- batch on the lane axis (lane-dense loads)
    # w1_ref : (D_hid, D_in) -- PyTorch (out, in) layout; acts as W1^T here
    # b1_ref : (D_hid, 1)
    # w2_ref : (D_out, D_hid)
    # b2_ref : (D_out, 1)
    # o_ref  : (D_out, TB)   -- lane-dense output (unmasked vst)
    w1 = w1_ref[...]
    b1 = b1_ref[...]
    w2 = w2_ref[...]
    b2 = b2_ref[...]
    n_chunks = xt_ref.shape[1] // tc  # static

    def compute(start):
        xt = xt_ref[:, pl.ds(start, tc)]                                   # (D_in, tc)
        h = jnp.dot(w1, xt, preferred_element_type=jnp.float32)            # (D_hid, tc)
        h = jnp.tanh(h + b1)                                               # bias bcast over lanes
        y = jnp.dot(w2, h, preferred_element_type=jnp.float32)             # (D_out, tc)
        o_ref[:, pl.ds(start, tc)] = jnp.tanh(y + b2).astype(o_ref.dtype)

    if n_chunks == 1:
        compute(0)
    else:
        def body(c, carry):
            compute(pl.multiple_of(c * tc, tc))
            return carry
        jax.lax.fori_loop(0, n_chunks, body, 0, unroll=True)


def lin_forward(x, w1, b1, w2, b2, *, x_is_feature_major=False):
    """Forward pass of `Lin`: y = tanh(tanh(x @ w1.T + b1) @ w2.T + b2).

    Weights/biases use the PyTorch nn.Linear layout:
      w1: (20, 10) = (out_features, in_features), b1: (20,)
      w2: (1, 20),                                b2: (1,)
    x: (B, 10) by default. Pass x_is_feature_major=True and x of shape (10, B)
    to skip the wrapper-side transpose (one fewer HBM pass over x).
    Returns (B, 1) float32.
    """
    if x_is_feature_major:
        xt = x.astype(jnp.float32)          # (D_in, B)
        d_in, B = xt.shape
    else:
        B, d_in = x.shape
        xt = jnp.transpose(x.astype(jnp.float32))   # (D_in, B)

    d_hid, w1_in = w1.shape
    d_out, w2_in = w2.shape
    assert w1_in == d_in and w2_in == d_hid
    assert b1.shape == (d_hid,) and b2.shape == (d_out,)

    tb, tc = _pick_tiles(B)
    grid = (pl.cdiv(B, tb),)

    w1f = w1.astype(jnp.float32)
    w2f = w2.astype(jnp.float32)
    b1c = b1.reshape(d_hid, 1).astype(jnp.float32)
    b2c = b2.reshape(d_out, 1).astype(jnp.float32)

    yt = pl.pallas_call(
        functools.partial(_lin_kernel, tc=tc),
        out_shape=jax.ShapeDtypeStruct((d_out, B), jnp.float32),
        grid_spec=pl.GridSpec(
            grid=grid,
            in_specs=[
                pl.BlockSpec((d_in, tb), lambda i: (0, i)),      # x^T tile (batch on lanes)
                pl.BlockSpec((d_hid, d_in), lambda i: (0, 0)),   # W1 (untiled, PyTorch layout)
                pl.BlockSpec((d_hid, 1), lambda i: (0, 0)),      # b1
                pl.BlockSpec((d_out, d_hid), lambda i: (0, 0)),  # W2
                pl.BlockSpec((d_out, 1), lambda i: (0, 0)),      # b2
            ],
            out_specs=pl.BlockSpec((d_out, tb), lambda i: (0, i)),
        ),
        compiler_params=pltpu.CompilerParams(
            dimension_semantics=("parallel",),
            vmem_limit_bytes=32 * 1024 * 1024,
        ),
    )(xt, w1f, b1c, w2f, b2c)

    return jnp.transpose(yt)   # (B, D_out) == (B, 1)


def init_params(key):
    """Deterministic init mimicking PyTorch nn.Linear default:
    U(-1/sqrt(fan_in), 1/sqrt(fan_in)), with PyTorch (out, in) weight layout."""
    k1, k2, k3, k4 = jax.random.split(key, 4)
    bound1 = 1.0 / jnp.sqrt(10.0)
    bound2 = 1.0 / jnp.sqrt(20.0)
    w1 = jax.random.uniform(k1, (20, 10), jnp.float32, -bound1, bound1)
    b1 = jax.random.uniform(k2, (20,), jnp.float32, -bound1, bound1)
    w2 = jax.random.uniform(k3, (1, 20), jnp.float32, -bound2, bound2)
    b2 = jax.random.uniform(k4, (1,), jnp.float32, -bound2, bound2)
    return w1, b1, w2, b2


def _reference(x, w1, b1, w2, b2):
    return jnp.tanh(jnp.tanh(x @ w1.T + b1) @ w2.T + b2)


if __name__ == "__main__":
    key = jax.random.PRNGKey(0)
    kx, kx2, kp = jax.random.split(key, 3)
    w1, b1, w2, b2 = init_params(kp)

    # Small-batch check (single exact block, one chunk).
    B = 8
    x = jax.random.normal(kx, (B, 10), jnp.float32)
    out = jax.block_until_ready(lin_forward(x, w1, b1, w2, b2))
    ref = _reference(x, w1, b1, w2, b2)
    assert out.shape == (B, 1)
    assert jnp.allclose(out, ref, atol=1e-5, rtol=1e-5)

    # Feature-major input path (skips wrapper transpose).
    out_fm = jax.block_until_ready(
        lin_forward(jnp.transpose(x), w1, b1, w2, b2, x_is_feature_major=True))
    assert jnp.allclose(out_fm, ref, atol=1e-5, rtol=1e-5)

    # Medium-batch check: exercises grid > 1, in-kernel chunk loop, and the
    # partial last block (no wrapper padding).
    B2 = 5000
    x2 = jax.random.normal(kx2, (B2, 10), jnp.float32)
    out2 = jax.block_until_ready(lin_forward(x2, w1, b1, w2, b2))
    ref2 = _reference(x2, w1, b1, w2, b2)
    assert out2.shape == (B2, 1)
    assert jnp.allclose(out2, ref2, atol=1e-5, rtol=1e-5)

    print("KERNEL_OK")
</pallas_src>

<mosaic_0001>
module attributes {stable_mosaic.version = 11 : i64} {
  func.func @_lin_kernel(%arg0: i32, %arg1: memref<10x8xf32, #tpu.memory_space<vmem>>, %arg2: memref<20x10xf32, #tpu.memory_space<vmem>>, %arg3: memref<20x1xf32, #tpu.memory_space<vmem>>, %arg4: memref<1x20xf32, #tpu.memory_space<vmem>>, %arg5: memref<1x1xf32, #tpu.memory_space<vmem>>, %arg6: memref<1x8xf32, #tpu.memory_space<vmem>>) attributes {dimension_semantics = [#tpu.dimension_semantics<parallel>], iteration_bounds = array<i64: 1>, scalar_prefetch = 0 : i64, scratch_operands = 0 : i64, tpu.core_type = #tpu.core_type<tc>, window_params = [{transform_indices = @transform_0, window_bounds = array<i64: 10, 8>}, {pipeline_mode = #tpu.pipeline_mode<synchronous>, transform_indices = @transform_1, window_bounds = array<i64: 20, 10>}, {pipeline_mode = #tpu.pipeline_mode<synchronous>, transform_indices = @transform_2, window_bounds = array<i64: 20, 1>}, {pipeline_mode = #tpu.pipeline_mode<synchronous>, transform_indices = @transform_3, window_bounds = array<i64: 1, 20>}, {pipeline_mode = #tpu.pipeline_mode<synchronous>, transform_indices = @transform_4, window_bounds = array<i64: 1, 1>}, {transform_indices = @transform_5, window_bounds = array<i64: 1, 8>}]} {
    %c0 = arith.constant 0 : index
    %c0_0 = arith.constant 0 : index
    %0 = vector.load %arg2[%c0, %c0_0] : memref<20x10xf32, #tpu.memory_space<vmem>>, vector<20x10xf32>
    %c0_1 = arith.constant 0 : index
    %c0_2 = arith.constant 0 : index
    %1 = vector.load %arg3[%c0_1, %c0_2] : memref<20x1xf32, #tpu.memory_space<vmem>>, vector<20x1xf32>
    %c0_3 = arith.constant 0 : index
    %c0_4 = arith.constant 0 : index
    %2 = vector.load %arg4[%c0_3, %c0_4] : memref<1x20xf32, #tpu.memory_space<vmem>>, vector<1x20xf32>
    %c0_5 = arith.constant 0 : index
    %c0_6 = arith.constant 0 : index
    %3 = vector.load %arg5[%c0_5, %c0_6] : memref<1x1xf32, #tpu.memory_space<vmem>>, vector<1x1xf32>
    %c0_7 = arith.constant 0 : index
    %c0_8 = arith.constant 0 : index
    %4 = vector.load %arg1[%c0_7, %c0_8] : memref<10x8xf32, #tpu.memory_space<vmem>>, vector<10x8xf32>
    %cst = arith.constant dense<0.000000e+00> : vector<20x8xf32>
    %5 = tpu.matmul %0, %4, %cst {dimension_numbers = #tpu.dot_dimension_numbers<[1], [0], [0], [1], [0, 0, 1, 1], [], []>} : vector<20x10xf32>, vector<10x8xf32>, vector<20x8xf32> -> vector<20x8xf32>
    %6 = vector.broadcast %1 : vector<20x1xf32> to vector<20x8xf32>
    %7 = arith.addf %5, %6 : vector<20x8xf32>
    %8 = math.tanh %7 : vector<20x8xf32>
    %cst_9 = arith.constant dense<0.000000e+00> : vector<1x8xf32>
    %9 = tpu.matmul %2, %8, %cst_9 {dimension_numbers = #tpu.dot_dimension_numbers<[1], [0], [0], [1], [0, 0, 1, 1], [], []>} : vector<1x20xf32>, vector<20x8xf32>, vector<1x8xf32> -> vector<1x8xf32>
    %10 = vector.broadcast %3 : vector<1x1xf32> to vector<1x8xf32>
    %11 = arith.addf %9, %10 : vector<1x8xf32>
    %12 = math.tanh %11 : vector<1x8xf32>
    %c0_10 = arith.constant 0 : index
    %c0_11 = arith.constant 0 : index
    %13 = vector.load %arg6[%c0_10, %c0_11] : memref<1x8xf32, #tpu.memory_space<vmem>>, vector<1x8xf32>
    tpu.vector_store %arg6[%c0_10, %c0_11], %12 {strides = array<i32>} : memref<1x8xf32, #tpu.memory_space<vmem>>, vector<1x8xf32>,
    return
  }
  func.func @transform_0(%arg0: i32) -> (i32, i32) {
    %c0_i32 = arith.constant 0 : i32
    %c0_i32_0 = arith.constant 0 : i32
    return %c0_i32, %arg0 : i32, i32
  }
  func.func @transform_1(%arg0: i32) -> (i32, i32) {
    %c0_i32 = arith.constant 0 : i32
    %c0_i32_0 = arith.constant 0 : i32
    %c0_i32_1 = arith.constant 0 : i32
    return %c0_i32, %c0_i32_0 : i32, i32
  }
  func.func @transform_2(%arg0: i32) -> (i32, i32) {
    %c0_i32 = arith.constant 0 : i32
    %c0_i32_0 = arith.constant 0 : i32
    %c0_i32_1 = arith.constant 0 : i32
    return %c0_i32, %c0_i32_0 : i32, i32
  }
  func.func @transform_3(%arg0: i32) -> (i32, i32) {
    %c0_i32 = arith.constant 0 : i32
    %c0_i32_0 = arith.constant 0 : i32
    %c0_i32_1 = arith.constant 0 : i32
    return %c0_i32, %c0_i32_0 : i32, i32
  }
  func.func @transform_4(%arg0: i32) -> (i32, i32) {
    %c0_i32 = arith.constant 0 : i32
    %c0_i32_0 = arith.constant 0 : i32
    %c0_i32_1 = arith.constant 0 : i32
    return %c0_i32, %c0_i32_0 : i32, i32
  }
  func.func @transform_5(%arg0: i32) -> (i32, i32) {
    %c0_i32 = arith.constant 0 : i32
    %c0_i32_0 = arith.constant 0 : i32
    return %c0_i32, %arg0 : i32, i32
  }
}

</mosaic_0001>

<llo_original>
// kernel: tpu_custom_call.1
$region0: #{tpu_custom_call.1}
  #allocation0 [shape = 'u32[]', space=smem, size = 0x4, offset = 0x4, fixed_abs, tag = 'smem constant byte address 0x4 - core index']
  #allocation1 [shape = 'u32[144,128]{1,0:T(1,128)}', space=vmem, size = 0x12000, scoped, tag = 'internal scratch']
  #allocation2 [shape = 'f32[1,1]{1,0:T(1,128)S(1)}', space=vmem, size = 0x200, scoped, tag = 'scoped memory for tpu_custom_call.1']
  %s0 = inlined_call_operand.vmem [shape: f32[10,8], index: 0, kind: input, shape index: {}]
  %s1 = inlined_call_operand.vmem [shape: f32[20,10], index: 1, kind: input, shape index: {}]
  %s2 = inlined_call_operand.vmem [shape: f32[20,1], index: 2, kind: input, shape index: {}]
  %s3 = inlined_call_operand.vmem [shape: f32[1,20], index: 3, kind: input, shape index: {}]
  %s4 = inlined_call_operand.<no memory space> [shape: f32[1,1], index: 4, kind: input, shape index: {}]
  %s5 = inlined_call_operand.hbm [shape: f32[1,8], index: 5, kind: output, shape index: {}]
  %s6 = sld [smem:[#allocation0]]
  $region30: #{tpu_custom_call.1} parent=0
    _
  %s8 = ssub.s32 1, %s6
  %s9 = scalar_select 0, %s8, %s6
  %v10 = vstv %s4
  %11 = vst [vmem:[#allocation2] sm:$0x1] %v10
  $region1: #{tpu_custom_call.1} parent=0
    #allocation3 [shape = 'u8[512]{0}', space=vmem, size = 0x400, scoped, tag = 'output window, operand 0, single buffered']
    #allocation4 [shape = 's32[1]{0}', space=sflag, size = 0x4, scoped, tag = 'scoped memory for tpu_custom_call.1']
    %12 = vsyncpa [#allocation4], 0
    // Predicated region
    $region2: #{tpu_custom_call.1} parent=1 // pred_check
      _
    $region3: #{tpu_custom_call.1} parent=1 // pred_check_branch
      %14 = sbr.rel (0) target = $region5
    $region4: #{tpu_custom_call.1} parent=1 // pred_region
      _
    $region5: #{tpu_custom_call.1} parent=1 // pred_fallthru
      _
    // Predicated region
    $region6: #{tpu_custom_call.1} parent=1 // pred_check
      _
    $region7: #{tpu_custom_call.1} parent=1 // pred_check_branch
      %16 = sbr.rel (0) target = $region9
    $region8: #{tpu_custom_call.1} parent=1 // pred_region
      _
    $region9: #{tpu_custom_call.1} parent=1 // pred_fallthru
      _
    // Predicated region
    $region10: #{tpu_custom_call.1} parent=1 // pred_check
      _
    $region11: #{tpu_custom_call.1} parent=1 // pred_check_branch
      %18 = sbr.rel (0) target = $region13
    $region12: #{tpu_custom_call.1} parent=1 // pred_region
      _
    $region13: #{tpu_custom_call.1} parent=1 // pred_fallthru
      _
    // Predicated region
    $region14: #{tpu_custom_call.1} parent=1 // pred_check
      _
    $region15: #{tpu_custom_call.1} parent=1 // pred_check_branch
      %20 = sbr.rel (0) target = $region17
    $region16: #{tpu_custom_call.1} parent=1 // pred_region
      _
    $region17: #{tpu_custom_call.1} parent=1 // pred_fallthru
      _
    // Predicated region
    $region18: #{tpu_custom_call.1} parent=1 // pred_check
      _
    $region19: #{tpu_custom_call.1} parent=1 // pred_check_branch
      %22 = sbr.rel (0) target = $region21
    $region20: #{tpu_custom_call.1} parent=1 // pred_region
      _
    $region21: #{tpu_custom_call.1} parent=1 // pred_fallthru
      _
    %v23 = vld [vmem:[%s1] sm:$0xff]
    %v24 = vld [vmem:[%s1 + $0x8] sm:$0xff]
    %v25 = vld [vmem:[%s1 + $0x10] sm:$0xf]
    %v26 = vld [vmem:[%s2] sm:$0xff]
    %v27 = vld [vmem:[%s2 + $0x8] sm:$0xff]
    %v28 = vld [vmem:[%s2 + $0x10] sm:$0xf]
    %v29 = vld [vmem:[%s3] sm:$0x1]
    %v30 = vld [vmem:[#allocation2] sm:$0x1]
    %v31 = vld [vmem:[%s0] sm:$0xff]
    %v32 = vld [vmem:[%s0 + $0x8] sm:$0x3]
    %34 = vset.pattern.permute.xlu0 0
    %35 = vperm.xlu0 %34, %v26
    %v36 = vpop.permute.xlu0 %35
    %39 = vset.pattern.permute.xlu0 0
    %40 = vperm.xlu0 %39, %v27
    %v41 = vpop.permute.xlu0 %40
    %44 = vset.pattern.permute.xlu0 0
    %45 = vperm.xlu0 %44, %v28
    %v46 = vpop.permute.xlu0 %45
    %vm48 = vcmask 80896
    %v50 = vsel %vm48, %v23, 0
    %v53 = vsel %vm48, %v24, 0
    %v56 = vsel %vm48, %v25, 0
    %vm58 = vcmask 1041408
    %v60 = vsel %vm58, %v32, 0
    %62 = vmatprep.subr.mxu0 0.0
    %63 = vmatpush1.msra.mxu0 %v31
    %64 = vmatprep.subr.mxu0 0.0
    %65 = vmatpush1.msra.mxu0 %v60
    %66 = vmatprep.subr.mxu0 0.0
    %67 = vmatpush1.msra.mxu0 0.0
    %68 = vmatprep.subr.mxu0 0.0
    %69 = vmatpush1.msra.mxu0 0.0
    %70 = vmatprep.subr.mxu0 0.0
    %71 = vmatpush1.msra.mxu0 0.0
    %72 = vmatprep.subr.mxu0 0.0
    %73 = vmatpush1.msra.mxu0 0.0
    %74 = vmatprep.subr.mxu0 0.0
    %75 = vmatpush1.msra.mxu0 0.0
    %76 = vmatprep.subr.mxu0 0.0
    %77 = vmatpush1.msra.mxu0 0.0
    %78 = vmatprep.subr.mxu0 0.0
    %79 = vmatpush1.msra.mxu0 0.0
    %80 = vmatprep.subr.mxu0 0.0
    %81 = vmatpush1.msra.mxu0 0.0
    %82 = vmatprep.subr.mxu0 0.0
    %83 = vmatpush1.msra.mxu0 0.0
    %84 = vmatprep.subr.mxu0 0.0
    %85 = vmatpush1.msra.mxu0 0.0
    %86 = vmatprep.subr.mxu0 0.0
    %87 = vmatpush1.msra.mxu0 0.0
    %88 = vmatprep.subr.mxu0 0.0
    %89 = vmatpush1.msra.mxu0 0.0
    %90 = vmatprep.subr.mxu0 0.0
    %91 = vmatpush1.msra.mxu0 0.0
    %92 = vmatprep.subr.mxu0 0.0
    %93 = vmatpush1.msra.mxu0 0.0
    %94 = vmatprep.subr.mxu0 0.0
    %95 = vmatpush1.msra.mxu0 0.0
    %96 = vmatprep.subr.mxu0 0.0
    %97 = vmatpush1.msra.mxu0 0.0
    %98 = vmatprep.subr.mxu0 0.0
    %99 = vmatpush1.msra.mxu0 0.0
    %100 = vmatprep.subr.mxu0 0.0
    %101 = vmatpush1.msra.mxu0 0.0
    %102 = vmatprep.subr.mxu0 0.0
    %103 = vmatpush1.msra.mxu0 0.0
    %104 = vmatprep.subr.mxu0 0.0
    %105 = vmatpush1.msra.mxu0 0.0
    %106 = vmatprep.subr.mxu0 0.0
    %107 = vmatpush1.msra.mxu0 0.0
    %108 = vmatprep.subr.mxu0 0.0
    %109 = vmatpush1.msra.mxu0 0.0
    %110 = vmatprep.subr.mxu0 0.0
    %111 = vmatpush1.msra.mxu0 0.0
    %112 = vmatprep.subr.mxu0 0.0
    %113 = vmatpush1.msra.mxu0 0.0
    %114 = vmatprep.subr.mxu0 0.0
    %115 = vmatpush1.msra.mxu0 0.0
    %116 = vmatprep.subr.mxu0 0.0
    %117 = vmatpush1.msra.mxu0 0.0
    %118 = vmatprep.subr.mxu0 0.0
    %119 = vmatpush1.msra.mxu0 0.0
    %120 = vmatprep.subr.mxu0 0.0
    %121 = vmatpush1.msra.mxu0 0.0
    %122 = vmatprep.subr.mxu0 0.0
    %123 = vmatpush1.msra.mxu0 0.0
    %124 = vmatprep.subr.mxu0 0.0
    %125 = vmatpush1.msra.mxu0 0.0
    %126 = vmatprep.mubr.f32.mxu0 0.0
    %127 = vmatmul.mubr.f32.gmra.mrb[0].mxu0 %v50
    %v128 = vpop.f32.mrb[0].mxu0
    %v129 = vadd.f32 %v36, %v128
    %v130 = vpop.f32.mrb[0].mxu0
    %131 = vmatprep.mubr.f32.mxu0 0.0
    %132 = vmatmul.mubr.f32.gmra.mrb[0].mxu0 %v53
    %v133 = vpop.f32.mrb[0].mxu0
    %v134 = vadd.f32 %v41, %v133
    %v135 = vpop.f32.mrb[0].mxu0
    %136 = vmatprep.mubr.f32.mxu0 0.0
    %137 = vmatmul.mubr.f32.gmra.mrb[0].mxu0 %v56
    %v138 = vpop.f32.mrb[0].mxu0
    %v139 = vadd.f32 %v46, %v138
    %v140 = vpop.f32.mrb[0].mxu0
    %141 = vdwg.mxu0
    %v142 = vtanh.pop %v129
    %v143 = vtanh.pop %v134
    %v144 = vtanh.pop %v139
    %146 = vset.pattern.permute.xlu0 0
    %147 = vperm.xlu0 %146, %v30
    %v148 = vpop.permute.xlu0 %147
    %v150 = vlaneseq
    %v151 = vshrl.u32 %v150, 7
    %v152 = vsub.s32 0, %v151
    %v153 = vrot.slane %v148, %v152
    %vm154 = vcmask 162816
    %v156 = vsel %vm154, %v29, 0
    %vm158 = vcmask 1043456
    %v160 = vsel %vm158, %v144, 0
    %162 = vmatprep.subr.mxu0 0.0
    %163 = vmatpush1.msra.mxu0 %v142
    %164 = vmatprep.subr.mxu0 0.0
    %165 = vmatpush1.msra.mxu0 %v143
    %166 = vmatprep.subr.mxu0 0.0
    %167 = vmatpush1.msra.mxu0 %v160
    %168 = vmatprep.subr.mxu0 0.0
    %169 = vmatpush1.msra.mxu0 0.0
    %170 = vmatprep.subr.mxu0 0.0
    %171 = vmatpush1.msra.mxu0 0.0
    %172 = vmatprep.subr.mxu0 0.0
    %173 = vmatpush1.msra.mxu0 0.0
    %174 = vmatprep.subr.mxu0 0.0
    %175 = vmatpush1.msra.mxu0 0.0
    %176 = vmatprep.subr.mxu0 0.0
    %177 = vmatpush1.msra.mxu0 0.0
    %178 = vmatprep.subr.mxu0 0.0
    %179 = vmatpush1.msra.mxu0 0.0
    %180 = vmatprep.subr.mxu0 0.0
    %181 = vmatpush1.msra.mxu0 0.0
    %182 = vmatprep.subr.mxu0 0.0
    %183 = vmatpush1.msra.mxu0 0.0
    %184 = vmatprep.subr.mxu0 0.0
    %185 = vmatpush1.msra.mxu0 0.0
    %186 = vmatprep.subr.mxu0 0.0
    %187 = vmatpush1.msra.mxu0 0.0
    %188 = vmatprep.subr.mxu0 0.0
    %189 = vmatpush1.msra.mxu0 0.0
    %190 = vmatprep.subr.mxu0 0.0
    %191 = vmatpush1.msra.mxu0 0.0
    %192 = vmatprep.subr.mxu0 0.0
    %193 = vmatpush1.msra.mxu0 0.0
    %194 = vmatprep.subr.mxu0 0.0
    %195 = vmatpush1.msra.mxu0 0.0
    %196 = vmatprep.subr.mxu0 0.0
    %197 = vmatpush1.msra.mxu0 0.0
    %198 = vmatprep.subr.mxu0 0.0
    %199 = vmatpush1.msra.mxu0 0.0
    %200 = vmatprep.subr.mxu0 0.0
    %201 = vmatpush1.msra.mxu0 0.0
    %202 = vmatprep.subr.mxu0 0.0
    %203 = vmatpush1.msra.mxu0 0.0
    %204 = vmatprep.subr.mxu0 0.0
    %205 = vmatpush1.msra.mxu0 0.0
    %206 = vmatprep.subr.mxu0 0.0
    %207 = vmatpush1.msra.mxu0 0.0
    %208 = vmatprep.subr.mxu0 0.0
    %209 = vmatpush1.msra.mxu0 0.0
    %210 = vmatprep.subr.mxu0 0.0
    %211 = vmatpush1.msra.mxu0 0.0
    %212 = vmatprep.subr.mxu0 0.0
    %213 = vmatpush1.msra.mxu0 0.0
    %214 = vmatprep.subr.mxu0 0.0
    %215 = vmatpush1.msra.mxu0 0.0
    %216 = vmatprep.subr.mxu0 0.0
    %217 = vmatpush1.msra.mxu0 0.0
    %218 = vmatprep.subr.mxu0 0.0
    %219 = vmatpush1.msra.mxu0 0.0
    %220 = vmatprep.subr.mxu0 0.0
    %221 = vmatpush1.msra.mxu0 0.0
    %222 = vmatprep.subr.mxu0 0.0
    %223 = vmatpush1.msra.mxu0 0.0
    %224 = vmatprep.subr.mxu0 0.0
    %225 = vmatpush1.msra.mxu0 0.0
    %226 = vmatprep.mubr.f32.mxu0 0.0
    %227 = vmatmul.mubr.f32.gmra.mrb[0].mxu0 %v156
    %v228 = vpop.f32.mrb[0].mxu0
    %v229 = vadd.f32 %v153, %v228
    %v230 = vpop.f32.mrb[0].mxu0
    %231 = vdwg.mxu0
    %v232 = vtanh.pop %v229
    %vm233 = vcmask 57344
    %234 = vst.msk [vmem:[#allocation3] sm:$0x1] %vm233, %v232
    // Predicated region
    $region22: #{tpu_custom_call.1} parent=1 // pred_check
      _
    $region23: #{tpu_custom_call.1} parent=1 // pred_check_branch
      %236 = sbr.rel (0) target = $region25
    $region24: #{tpu_custom_call.1} parent=1 // pred_region
      %s238 = ssub.s32 16, 16
      %239 = vsyncadd [#allocation4], %s238
      %s241 = sshll.u32 [#allocation3], 4
      %s242 = int_to_ptr.vmem [resolvable:$true] %s241
      %244 = dma.vmem_to_hbm [thread:$0]  %s242, 16, %s5, [#allocation4]
    $region25: #{tpu_custom_call.1} parent=1 // pred_fallthru
      _
    // Predicated region
    $region26: #{tpu_custom_call.1} parent=1 // pred_check
      _
    $region27: #{tpu_custom_call.1} parent=1 // pred_check_branch
      %246 = sbr.rel (0) target = $region29
    $region28: #{tpu_custom_call.1} parent=1 // pred_region
      %247 = dma.done [#allocation4], 16
    $region29: #{tpu_custom_call.1} parent=1 // pred_fallthru
      _
    %248 = vsyncpa [#allocation4], 1

</llo_original>
